<compile_context>
chip_gen: v7x
topology: tpu7x:2x2x1
jax: 0.10.0
libtpu: 0.0.40
codegen_flags: <defaults>
</compile_context>

<pallas_src>
import jax
import jax.numpy as jnp
from jax.experimental import pallas as pl
from jax.experimental.pallas import tpu as pltpu


# ---------------------------------------------------------------------------
# Compile-time constants (identical math to the PyTorch module's __init__).
# The registered buffer is base.T, and tensordot(x - shift, base.T, dims=1)
# means   out[..., c] = sum_k (x[..., k] - shift[k]) * base[c][k],
# so _BASE[c][k] is the coefficient of input channel k for output channel c.
# ---------------------------------------------------------------------------
_KR, _KG, _KB = 0.299, 0.587, 0.114
_BASE = (
    (1.0, 0.0, 2.0 - 2.0 * _KR),
    (1.0, -_KB / _KG * (2.0 - 2.0 * _KB), -_KR / _KG * (2.0 - 2.0 * _KR)),
    (1.0, 2.0 - 2.0 * _KB, 0.0),
)
_SHIFT = (0.0, 0.5, 0.5)
# Fold the shift into a per-output-channel bias: out_c = sum_k in_k*m_ck + bias_c
_BIAS = tuple(
    -(_SHIFT[0] * _BASE[c][0] + _SHIFT[1] * _BASE[c][1] + _SHIFT[2] * _BASE[c][2])
    for c in range(3)
)

_LANE = 128
_MAX_ROW_TILE = 2048                  # rows of 128 lanes per step (f32: 3 MiB in)
_TARGET_PIX = _MAX_ROW_TILE * _LANE   # ~256K pixels / channel per grid step
_MAX_BLOCK_BYTES = 4 * 1024 * 1024    # safety cap for the no-pad (H, W) path
_VMEM_LIMIT = 32 * 1024 * 1024        # safe scoped-VMEM request on v5e/v6e/v7x


def _round_up(x, m):
    return -(-x // m) * m


def _affine_channel(y, cb, cr, c):
    """out_c = y*m_c0 + cb*m_c1 + cr*m_c2 + bias_c, skipping 0/1 coefficients."""
    terms = []
    for x, m in ((y, _BASE[c][0]), (cb, _BASE[c][1]), (cr, _BASE[c][2])):
        if m == 1.0:
            terms.append(x)
        elif m != 0.0:
            terms.append(x * m)
    val = terms[0]
    for t in terms[1:]:
        val = val + t
    if _BIAS[c] != 0.0:
        val = val + _BIAS[c]
    return val


def _ycbcr2rgb_kernel(img_ref, out_ref):
    # Block: (B_TILE, 3, X, Y) in VMEM.  Pure element-wise VPU work; the op is
    # HBM-bound so f32 compute is free.
    # TODO(synk): optional bf16 compute path for bf16 inputs on v6e/v7x (would
    # only shrink VMEM temporaries; HBM traffic is already set by the I/O dtype).
    y = img_ref[:, 0].astype(jnp.float32)
    cb = img_ref[:, 1].astype(jnp.float32)
    cr = img_ref[:, 2].astype(jnp.float32)
    for c in range(3):
        val = _affine_channel(y, cb, cr, c)
        out_ref[:, c] = jnp.clip(val, 0.0, 1.0).astype(out_ref.dtype)


def _call(x, block, grid):
    return pl.pallas_call(
        _ycbcr2rgb_kernel,
        out_shape=jax.ShapeDtypeStruct(x.shape, x.dtype),
        grid=grid,
        in_specs=[pl.BlockSpec(block, lambda b, r: (b, 0, r, 0))],
        out_specs=pl.BlockSpec(block, lambda b, r: (b, 0, r, 0)),
        compiler_params=pltpu.CompilerParams(
            dimension_semantics=("parallel", "parallel"),
            vmem_limit_bytes=_VMEM_LIMIT,
        ),
    )(x)


def _run_flat(img, n, h, w, p, padded):
    """Lane-dense (rows, 128) layout.  padded=True only for the rare fallback."""
    if padded:
        rows = pl.cdiv(p, _LANE)
        p_pad = rows * _LANE
        x = img.reshape(n, 3, p)
        x = jnp.pad(x, ((0, 0), (0, 0), (0, p_pad - p)))
        x = x.reshape(n, 3, rows, _LANE)
    else:
        rows = p // _LANE
        p_pad = p
        x = img.reshape(n, 3, rows, _LANE)   # contiguous -> free reshape

    if rows <= _MAX_ROW_TILE:
        r_tile = rows                         # == full dim, tiling rule ok
        b_tile = min(n, max(1, _TARGET_PIX // p_pad))
        # If everything would land in a single grid step, split the rows so the
        # two v7x TensorCores both get work (cheap on single-TC chips).
        if pl.cdiv(n, b_tile) == 1 and rows >= 512:
            r_tile = _round_up(pl.cdiv(rows, 2), 8)
    else:
        r_tile = _MAX_ROW_TILE                # multiple of 8
        b_tile = 1

    grid = (pl.cdiv(n, b_tile), pl.cdiv(rows, r_tile))
    out = _call(x, (b_tile, 3, r_tile, _LANE), grid)

    out = out.reshape(n, 3, p_pad)
    if padded:
        out = out[:, :, :p]
    return out.reshape(n, 3, h, w)


def _pick_2d_tiles(n, h, w):
    """Tile sizes for the no-pad (N,3,H,W) path (H*W not a multiple of 128)."""
    pix = h * w
    if pix <= _TARGET_PIX:
        # whole image per block; batch several images to keep blocks large
        return min(n, max(1, _TARGET_PIX // pix)), h
    # single image is already big enough: tile over image rows
    th = (_TARGET_PIX // w) // 8 * 8
    if th < 8:
        th = 8
    if th >= h:
        th = h
    return 1, th


def ycbcr2rgb(img: jax.Array) -> jax.Array:
    if img.ndim != 4 or img.shape[1] != 3:
        raise ValueError(
            "Input image must be 4D tensor with a size of 3 in the second dimension."
        )
    n, _, h, w = img.shape
    p = h * w

    if p % _LANE == 0:
        # Lane-dense flat layout, no padding / slicing passes.
        return _run_flat(img, n, h, w, p, padded=False)

    # H*W not a multiple of 128: tile the original layout directly (no pad),
    # block last dim = full W satisfies the tiling rule.
    b_tile, th = _pick_2d_tiles(n, h, w)
    block_bytes = b_tile * 3 * th * w * int(img.dtype.itemsize)
    if block_bytes <= _MAX_BLOCK_BYTES:
        grid = (pl.cdiv(n, b_tile), pl.cdiv(h, th))
        return _call(img, (b_tile, 3, th, w), grid)

    # Pathologically wide unaligned rows only: pad to lane-dense layout.
    return _run_flat(img, n, h, w, p, padded=True)


def ycbcr2rgb_ref(img: jax.Array) -> jax.Array:
    """Plain-JAX reference mirroring the PyTorch forward exactly (incl. clamp)."""
    y = img[:, 0].astype(jnp.float32)
    cb = img[:, 1].astype(jnp.float32) - _SHIFT[1]
    cr = img[:, 2].astype(jnp.float32) - _SHIFT[2]
    chans = [
        _BASE[c][0] * y + _BASE[c][1] * cb + _BASE[c][2] * cr for c in range(3)
    ]
    res = jnp.stack(chans, axis=1)
    return jnp.clip(res, 0.0, 1.0).astype(img.dtype)


if __name__ == "__main__":
    key = jax.random.PRNGKey(0)

    shapes = [
        (2, 3, 16, 16),     # aligned, tiny, whole batch in one block
        (2, 3, 17, 19),     # H*W not a multiple of 128 -> no-pad (H, W) path
        (1, 3, 160, 128),   # aligned, single block
        (17, 3, 128, 128),  # aligned, batch tiling with a batch boundary block
        (1, 3, 400, 416),   # aligned, row tiling with a row boundary block
    ]
    for i, shape in enumerate(shapes):
        k = jax.random.fold_in(key, i)
        img = jax.random.uniform(k, shape, dtype=jnp.float32)

        out = jax.block_until_ready(ycbcr2rgb(img))
        ref = ycbcr2rgb_ref(img)

        assert out.shape == ref.shape and out.dtype == ref.dtype, shape
        assert jnp.allclose(out, ref, atol=1e-5, rtol=1e-5), shape

    print("KERNEL_OK")
</pallas_src>

<mosaic_0001>
module attributes {stable_mosaic.version = 11 : i64} {
  func.func @_ycbcr2rgb_kernel(%arg0: i32, %arg1: i32, %arg2: memref<2x3x2x128xf32, #tpu.memory_space<vmem>>, %arg3: memref<2x3x2x128xf32, #tpu.memory_space<vmem>>) attributes {dimension_semantics = [#tpu.dimension_semantics<parallel>, #tpu.dimension_semantics<parallel>], iteration_bounds = array<i64: 1, 1>, scalar_prefetch = 0 : i64, scratch_operands = 0 : i64, tpu.core_type = #tpu.core_type<tc>, window_params = [{transform_indices = @transform_0, window_bounds = array<i64: 2, 3, 2, 128>}, {transform_indices = @transform_1, window_bounds = array<i64: 2, 3, 2, 128>}]} {
    %c0 = arith.constant 0 : index
    %c0_0 = arith.constant 0 : index
    %c0_1 = arith.constant 0 : index
    %c0_2 = arith.constant 0 : index
    %0 = vector.load %arg2[%c0, %c0_0, %c0_1, %c0_2] : memref<2x3x2x128xf32, #tpu.memory_space<vmem>>, vector<2x1x2x128xf32>
    %1 = vector.shape_cast %0 : vector<2x1x2x128xf32> to vector<2x2x128xf32>
    %c0_3 = arith.constant 0 : index
    %c1 = arith.constant 1 : index
    %c0_4 = arith.constant 0 : index
    %c0_5 = arith.constant 0 : index
    %2 = vector.load %arg2[%c0_3, %c1, %c0_4, %c0_5] : memref<2x3x2x128xf32, #tpu.memory_space<vmem>>, vector<2x1x2x128xf32>
    %3 = vector.shape_cast %2 : vector<2x1x2x128xf32> to vector<2x2x128xf32>
    %c0_6 = arith.constant 0 : index
    %c2 = arith.constant 2 : index
    %c0_7 = arith.constant 0 : index
    %c0_8 = arith.constant 0 : index
    %4 = vector.load %arg2[%c0_6, %c2, %c0_7, %c0_8] : memref<2x3x2x128xf32, #tpu.memory_space<vmem>>, vector<2x1x2x128xf32>
    %5 = vector.shape_cast %4 : vector<2x1x2x128xf32> to vector<2x2x128xf32>
    %cst = arith.constant 1.402000e+00 : f32
    %6 = vector.broadcast %cst : f32 to vector<2x2x128xf32>
    %7 = arith.mulf %5, %6 : vector<2x2x128xf32>
    %8 = arith.addf %1, %7 : vector<2x2x128xf32>
    %cst_9 = arith.constant -7.010000e-01 : f32
    %9 = vector.broadcast %cst_9 : f32 to vector<2x2x128xf32>
    %10 = arith.addf %8, %9 : vector<2x2x128xf32>
    %cst_10 = arith.constant 0.000000e+00 : f32
    %cst_11 = arith.constant 1.000000e+00 : f32
    %11 = vector.broadcast %cst_10 : f32 to vector<2x2x128xf32>
    %12 = arith.maximumf %11, %10 : vector<2x2x128xf32>
    %13 = vector.broadcast %cst_11 : f32 to vector<2x2x128xf32>
    %14 = arith.minimumf %13, %12 : vector<2x2x128xf32>
    %c0_12 = arith.constant 0 : index
    %c0_13 = arith.constant 0 : index
    %c0_14 = arith.constant 0 : index
    %c0_15 = arith.constant 0 : index
    %15 = vector.load %arg3[%c0_12, %c0_13, %c0_14, %c0_15] : memref<2x3x2x128xf32, #tpu.memory_space<vmem>>, vector<2x1x2x128xf32>
    %16 = vector.shape_cast %15 : vector<2x1x2x128xf32> to vector<2x2x128xf32>
    %17 = vector.shape_cast %14 : vector<2x2x128xf32> to vector<2x1x2x128xf32>
    tpu.vector_store %arg3[%c0_12, %c0_13, %c0_14, %c0_15], %17 {strides = array<i32>} : memref<2x3x2x128xf32, #tpu.memory_space<vmem>>, vector<2x1x2x128xf32>,
    %cst_16 = arith.constant -0.344136298 : f32
    %18 = vector.broadcast %cst_16 : f32 to vector<2x2x128xf32>
    %19 = arith.mulf %3, %18 : vector<2x2x128xf32>
    %cst_17 = arith.constant -0.714136302 : f32
    %20 = vector.broadcast %cst_17 : f32 to vector<2x2x128xf32>
    %21 = arith.mulf %5, %20 : vector<2x2x128xf32>
    %22 = arith.addf %1, %19 : vector<2x2x128xf32>
    %23 = arith.addf %22, %21 : vector<2x2x128xf32>
    %cst_18 = arith.constant 0.5291363 : f32
    %24 = vector.broadcast %cst_18 : f32 to vector<2x2x128xf32>
    %25 = arith.addf %23, %24 : vector<2x2x128xf32>
    %cst_19 = arith.constant 0.000000e+00 : f32
    %cst_20 = arith.constant 1.000000e+00 : f32
    %26 = vector.broadcast %cst_19 : f32 to vector<2x2x128xf32>
    %27 = arith.maximumf %26, %25 : vector<2x2x128xf32>
    %28 = vector.broadcast %cst_20 : f32 to vector<2x2x128xf32>
    %29 = arith.minimumf %28, %27 : vector<2x2x128xf32>
    %c0_21 = arith.constant 0 : index
    %c1_22 = arith.constant 1 : index
    %c0_23 = arith.constant 0 : index
    %c0_24 = arith.constant 0 : index
    %30 = vector.load %arg3[%c0_21, %c1_22, %c0_23, %c0_24] : memref<2x3x2x128xf32, #tpu.memory_space<vmem>>, vector<2x1x2x128xf32>
    %31 = vector.shape_cast %30 : vector<2x1x2x128xf32> to vector<2x2x128xf32>
    %32 = vector.shape_cast %29 : vector<2x2x128xf32> to vector<2x1x2x128xf32>
    tpu.vector_store %arg3[%c0_21, %c1_22, %c0_23, %c0_24], %32 {strides = array<i32>} : memref<2x3x2x128xf32, #tpu.memory_space<vmem>>, vector<2x1x2x128xf32>,
    %cst_25 = arith.constant 1.772000e+00 : f32
    %33 = vector.broadcast %cst_25 : f32 to vector<2x2x128xf32>
    %34 = arith.mulf %3, %33 : vector<2x2x128xf32>
    %35 = arith.addf %1, %34 : vector<2x2x128xf32>
    %cst_26 = arith.constant -0.885999977 : f32
    %36 = vector.broadcast %cst_26 : f32 to vector<2x2x128xf32>
    %37 = arith.addf %35, %36 : vector<2x2x128xf32>
    %cst_27 = arith.constant 0.000000e+00 : f32
    %cst_28 = arith.constant 1.000000e+00 : f32
    %38 = vector.broadcast %cst_27 : f32 to vector<2x2x128xf32>
    %39 = arith.maximumf %38, %37 : vector<2x2x128xf32>
    %40 = vector.broadcast %cst_28 : f32 to vector<2x2x128xf32>
    %41 = arith.minimumf %40, %39 : vector<2x2x128xf32>
    %c0_29 = arith.constant 0 : index
    %c2_30 = arith.constant 2 : index
    %c0_31 = arith.constant 0 : index
    %c0_32 = arith.constant 0 : index
    %42 = vector.load %arg3[%c0_29, %c2_30, %c0_31, %c0_32] : memref<2x3x2x128xf32, #tpu.memory_space<vmem>>, vector<2x1x2x128xf32>
    %43 = vector.shape_cast %42 : vector<2x1x2x128xf32> to vector<2x2x128xf32>
    %44 = vector.shape_cast %41 : vector<2x2x128xf32> to vector<2x1x2x128xf32>
    tpu.vector_store %arg3[%c0_29, %c2_30, %c0_31, %c0_32], %44 {strides = array<i32>} : memref<2x3x2x128xf32, #tpu.memory_space<vmem>>, vector<2x1x2x128xf32>,
    return
  }
  func.func @transform_0(%arg0: i32, %arg1: i32) -> (i32, i32, i32, i32) {
    %c0_i32 = arith.constant 0 : i32
    %c0_i32_0 = arith.constant 0 : i32
    %c0_i32_1 = arith.constant 0 : i32
    return %arg0, %c0_i32, %arg1, %c0_i32_0 : i32, i32, i32, i32
  }
  func.func @transform_1(%arg0: i32, %arg1: i32) -> (i32, i32, i32, i32) {
    %c0_i32 = arith.constant 0 : i32
    %c0_i32_0 = arith.constant 0 : i32
    %c0_i32_1 = arith.constant 0 : i32
    return %arg0, %c0_i32, %arg1, %c0_i32_0 : i32, i32, i32, i32
  }
}

</mosaic_0001>

<llo_original>
// kernel: tpu_custom_call.1
$region0: #{tpu_custom_call.1}
  #allocation0 [shape = 'u32[]', space=smem, size = 0x4, offset = 0x4, fixed_abs, tag = 'smem constant byte address 0x4 - core index']
  #allocation1 [shape = 'u32[144,128]{1,0:T(1,128)}', space=vmem, size = 0x12000, scoped, tag = 'internal scratch']
  %s0 = inlined_call_operand.hbm [shape: f32[2,3,2,128], index: 0, kind: input, shape index: {}]
  %s1 = inlined_call_operand.hbm [shape: f32[2,3,2,128], index: 1, kind: output, shape index: {}]
  %s2 = sld [smem:[#allocation0]]
  $region18: #{tpu_custom_call.1} parent=0
    _
  %s4 = ssub.s32 1, %s2
  %s5 = scalar_select 0, %s4, %s2
  $region1: #{tpu_custom_call.1} parent=0
    #allocation2 [shape = 'u8[6144]{0}', space=vmem, size = 0x1800, scoped, tag = 'input window, operand 0, single buffered']
    #allocation3 [shape = 's32[1]{0}', space=sflag, size = 0x4, scoped, tag = 'scoped memory for tpu_custom_call.1']
    #allocation4 [shape = 's32[1]{0}', space=sflag, size = 0x4, scoped, tag = 'scoped memory for tpu_custom_call.1']
    #allocation5 [shape = 'u8[6144]{0}', space=vmem, size = 0x1800, scoped, tag = 'output window, operand 0, single buffered']
    %6 = vsyncpa [#allocation3], 0
    %7 = vsyncpa [#allocation4], 0
    // Predicated region
    $region2: #{tpu_custom_call.1} parent=1 // pred_check
      _
    $region3: #{tpu_custom_call.1} parent=1 // pred_check_branch
      %9 = sbr.rel (0) target = $region5
    $region4: #{tpu_custom_call.1} parent=1 // pred_region
      %s11 = ssub.s32 192, 192
      %12 = vsyncadd [#allocation3], %s11
      %s13 = sshll.u32 [#allocation2], 4
      %s14 = int_to_ptr.vmem [resolvable:$true] %s13
      %19 = dma.hbm_to_vmem [thread:$0]  %s0, 192, %s14, [#allocation3], 32, 32, 2
    $region5: #{tpu_custom_call.1} parent=1 // pred_fallthru
      _
    // Predicated region
    $region6: #{tpu_custom_call.1} parent=1 // pred_check
      _
    $region7: #{tpu_custom_call.1} parent=1 // pred_check_branch
      %21 = sbr.rel (0) target = $region9
    $region8: #{tpu_custom_call.1} parent=1 // pred_region
      %22 = dma.done [#allocation3], 192
    $region9: #{tpu_custom_call.1} parent=1 // pred_fallthru
      _
    %v23 = vld [vmem:[#allocation2] sm:$0x3]
    %v24 = vld [vmem:[#allocation2 + $0x6] sm:$0x3]
    %s25 = scalar_lea.vmem [#allocation2], 2
    %v26 = vld [vmem:[%s25] sm:$0x3]
    %v27 = vld [vmem:[%s25 + $0x6] sm:$0x3]
    %s28 = scalar_lea.vmem [#allocation2], 4
    %v29 = vld [vmem:[%s28] sm:$0x3]
    %v30 = vld [vmem:[%s28 + $0x6] sm:$0x3]
    %v31 = vmul.f32 %v29, 1.402
    %v32 = vmul.f32 %v30, 1.402
    %v33 = vadd.f32 %v23, %v31
    %v34 = vadd.f32 %v24, %v32
    %v35 = vadd.f32 %v33, -0.701
    %v36 = vadd.f32 %v34, -0.701
    %v37 = vmax.f32 %v35, 0.0
    %v38 = vmax.f32 %v36, 0.0
    %v39 = vmin.f32 %v37, 1.0
    %v40 = vmin.f32 %v38, 1.0
    %41 = vst [vmem:[#allocation5] sm:$0x3] %v39
    %42 = vst [vmem:[#allocation5 + $0x6] sm:$0x3] %v40
    %v43 = vmul.f32 %v26, -0.3441363
    %v44 = vmul.f32 %v27, -0.3441363
    %v45 = vmul.f32 %v29, -0.7141363
    %v46 = vmul.f32 %v30, -0.7141363
    %v47 = vadd.f32 %v23, %v43
    %v48 = vadd.f32 %v24, %v44
    %v49 = vadd.f32 %v47, %v45
    %v50 = vadd.f32 %v48, %v46
    %v51 = vadd.f32 %v49, 0.5291363
    %v52 = vadd.f32 %v50, 0.5291363
    %v53 = vmax.f32 %v51, 0.0
    %v54 = vmax.f32 %v52, 0.0
    %v55 = vmin.f32 %v53, 1.0
    %v56 = vmin.f32 %v54, 1.0
    %s57 = scalar_lea.vmem [#allocation5], 2
    %58 = vst [vmem:[%s57] sm:$0x3] %v55
    %59 = vst [vmem:[%s57 + $0x6] sm:$0x3] %v56
    %v60 = vmul.f32 %v26, 1.772
    %v61 = vmul.f32 %v27, 1.772
    %v62 = vadd.f32 %v23, %v60
    %v63 = vadd.f32 %v24, %v61
    %v64 = vadd.f32 %v62, -0.886
    %v65 = vadd.f32 %v63, -0.886
    %v66 = vmax.f32 %v64, 0.0
    %v67 = vmax.f32 %v65, 0.0
    %v68 = vmin.f32 %v66, 1.0
    %v69 = vmin.f32 %v67, 1.0
    %s70 = scalar_lea.vmem [#allocation5], 4
    %71 = vst [vmem:[%s70] sm:$0x3] %v68
    %72 = vst [vmem:[%s70 + $0x6] sm:$0x3] %v69
    // Predicated region
    $region10: #{tpu_custom_call.1} parent=1 // pred_check
      _
    $region11: #{tpu_custom_call.1} parent=1 // pred_check_branch
      %74 = sbr.rel (0) target = $region13
    $region12: #{tpu_custom_call.1} parent=1 // pred_region
      %s76 = ssub.s32 192, 192
      %77 = vsyncadd [#allocation4], %s76
      %s78 = sshll.u32 [#allocation5], 4
      %s79 = int_to_ptr.vmem [resolvable:$true] %s78
      %84 = dma.vmem_to_hbm [thread:$0]  %s79, 192, %s1, [#allocation4], 32, 32, 2
    $region13: #{tpu_custom_call.1} parent=1 // pred_fallthru
      _
    // Predicated region
    $region14: #{tpu_custom_call.1} parent=1 // pred_check
      _
    $region15: #{tpu_custom_call.1} parent=1 // pred_check_branch
      %86 = sbr.rel (0) target = $region17
    $region16: #{tpu_custom_call.1} parent=1 // pred_region
      %87 = dma.done [#allocation4], 192
    $region17: #{tpu_custom_call.1} parent=1 // pred_fallthru
      _
    %88 = vsyncpa [#allocation3], 1
    %89 = vsyncpa [#allocation4], 1

</llo_original>
